<compile_context>
chip_gen: v6e
topology: v6e:2x2x1
jax: 0.10.0
libtpu: 0.0.40
codegen_flags: <defaults>
</compile_context>

<pallas_src>
import functools

import jax
import jax.numpy as jnp
from jax import lax
from jax.experimental import pallas as pl
from jax.experimental.pallas import tpu as pltpu


def _vmem_capacity_bytes(fallback=64 * 1024 * 1024):
    try:
        return int(pltpu.get_tpu_info().vmem_capacity_bytes)
    except Exception:
        return int(fallback)


_VMEM_CAP = _vmem_capacity_bytes()
_VMEM_LIMIT = int(0.7 * _VMEM_CAP)
_BIG_VMEM = _VMEM_CAP >= 100 * 1024 * 1024    # v5e/v6e: 128 MiB, v7x: 64 MiB

_DEF_BLOCK_M = 1024 if _BIG_VMEM else 512      # projection M tile
_DEF_BLOCK_N = 512                             # projection Dout tile
_DEF_BLOCK_K = 1024                            # projection Din tile
_DEF_BLOCK_ATTN = 512 if _BIG_VMEM else 256    # attention q / kv tiles


def _pick_k_tile(din, block_k):
    # Only K-tile when it divides cleanly (padding a ragged K block would
    # corrupt the accumulation); otherwise keep Din as a single block.
    if din > block_k and din % block_k == 0:
        return block_k
    return din


# ----------------------- fused Q/K/V projection kernel -----------------------

def _qkv_proj_kernel(x_ref, wq_ref, wk_ref, wv_ref, bq_ref, bk_ref, bv_ref,
                     q_ref, k_ref, v_ref, qacc, kacc, vacc, *, q_scale):
    kk = pl.program_id(2)

    @pl.when(kk == 0)
    def _init():
        qacc[...] = jnp.zeros_like(qacc)
        kacc[...] = jnp.zeros_like(kacc)
        vacc[...] = jnp.zeros_like(vacc)

    # x tile is read once and reused for all three MXU matmuls; operands stay
    # in the input dtype, accumulation in f32.
    x = x_ref[...]
    qacc[...] += jnp.dot(x, wq_ref[...], preferred_element_type=jnp.float32)
    kacc[...] += jnp.dot(x, wk_ref[...], preferred_element_type=jnp.float32)
    vacc[...] += jnp.dot(x, wv_ref[...], preferred_element_type=jnp.float32)

    @pl.when(kk == pl.num_programs(2) - 1)
    def _finalize():
        # 1/sqrt(d_head) folded into the Q epilogue (fuses with the bias add).
        q_ref[...] = ((qacc[...] + bq_ref[...].astype(jnp.float32))
                      * q_scale).astype(q_ref.dtype)
        k_ref[...] = (kacc[...]
                      + bk_ref[...].astype(jnp.float32)).astype(k_ref.dtype)
        v_ref[...] = (vacc[...]
                      + bv_ref[...].astype(jnp.float32)).astype(v_ref.dtype)


def qkv_projection(x2d, wq, wk, wv, bq, bk, bv, *, q_scale=1.0,
                   block_m=None, block_n=_DEF_BLOCK_N, block_k=_DEF_BLOCK_K):
    """q, k, v = (x @ w + b); the q output is additionally scaled by q_scale."""
    M, Din = x2d.shape
    Dout = wq.shape[1]
    if block_m is None:
        block_m = _DEF_BLOCK_M
    TM = min(M, block_m)
    TN = min(Dout, block_n)
    TK = _pick_k_tile(Din, block_k)

    # Grid: (N-blocks, M-blocks, K-blocks). N outermost so a weight column
    # strip is reused across the whole M sweep (Pallas skips re-DMA when a
    # block index is unchanged); K innermost for the accumulator pattern.
    grid = (pl.cdiv(Dout, TN), pl.cdiv(M, TM), Din // TK)

    x_spec = pl.BlockSpec((TM, TK), lambda j, i, kk: (i, kk))
    w_spec = pl.BlockSpec((TK, TN), lambda j, i, kk: (kk, j))
    b_spec = pl.BlockSpec((1, TN), lambda j, i, kk: (0, j))
    o_spec = pl.BlockSpec((TM, TN), lambda j, i, kk: (i, j))
    out_sds = jax.ShapeDtypeStruct((M, Dout), x2d.dtype)

    kernel = functools.partial(_qkv_proj_kernel, q_scale=q_scale)
    return pl.pallas_call(
        kernel,
        out_shape=(out_sds, out_sds, out_sds),
        grid=grid,
        in_specs=[x_spec, w_spec, w_spec, w_spec, b_spec, b_spec, b_spec],
        out_specs=(o_spec, o_spec, o_spec),
        scratch_shapes=[pltpu.VMEM((TM, TN), jnp.float32)] * 3,
        compiler_params=pltpu.CompilerParams(
            dimension_semantics=("parallel", "parallel", "arbitrary"),
            vmem_limit_bytes=_VMEM_LIMIT),
    )(x2d, wq, wk, wv,
      bq.reshape(1, Dout), bk.reshape(1, Dout), bv.reshape(1, Dout))


# ------------------------------ output projection -----------------------------

def _linear_kernel(x_ref, w_ref, b_ref, o_ref, acc_ref):
    kk = pl.program_id(2)

    @pl.when(kk == 0)
    def _init():
        acc_ref[...] = jnp.zeros_like(acc_ref)

    acc_ref[...] += jnp.dot(x_ref[...], w_ref[...],
                            preferred_element_type=jnp.float32)

    @pl.when(kk == pl.num_programs(2) - 1)
    def _finalize():
        o_ref[...] = (acc_ref[...]
                      + b_ref[...].astype(jnp.float32)).astype(o_ref.dtype)


def linear(x, w, b, *, block_m=None, block_n=_DEF_BLOCK_N,
           block_k=_DEF_BLOCK_K):
    """y = x @ w + b, tiled over M, Dout and Din (f32 accumulator scratch)."""
    M, Din = x.shape
    Dout = w.shape[1]
    if block_m is None:
        block_m = _DEF_BLOCK_M
    TM = min(M, block_m)
    TN = min(Dout, block_n)
    TK = _pick_k_tile(Din, block_k)
    grid = (pl.cdiv(Dout, TN), pl.cdiv(M, TM), Din // TK)

    return pl.pallas_call(
        _linear_kernel,
        out_shape=jax.ShapeDtypeStruct((M, Dout), x.dtype),
        grid=grid,
        in_specs=[
            pl.BlockSpec((TM, TK), lambda j, i, kk: (i, kk)),
            pl.BlockSpec((TK, TN), lambda j, i, kk: (kk, j)),
            pl.BlockSpec((1, TN), lambda j, i, kk: (0, j)),
        ],
        out_specs=pl.BlockSpec((TM, TN), lambda j, i, kk: (i, j)),
        scratch_shapes=[pltpu.VMEM((TM, TN), jnp.float32)],
        compiler_params=pltpu.CompilerParams(
            dimension_semantics=("parallel", "parallel", "arbitrary"),
            vmem_limit_bytes=_VMEM_LIMIT),
    )(x, w, b.reshape(1, Dout))


# --------------------------- flash-attention kernels --------------------------

def _online_softmax_step(q, k_blk, v_blk, col_valid, m_prev, l_prev, acc_prev):
    """One online-softmax update. MXU operands keep their input dtype;
    softmax math and accumulators are f32. Returns (m_new, l_new, acc_new)."""
    s = lax.dot_general(q, k_blk, (((1,), (1,)), ((), ())),
                        preferred_element_type=jnp.float32)        # [TQ, TK]
    if col_valid is not None:
        s = jnp.where(col_valid, s, -jnp.inf)
    m_new = jnp.maximum(m_prev, s.max(axis=-1, keepdims=True))
    alpha = jnp.exp(m_prev - m_new)
    p = jnp.exp(s - m_new)
    l_new = alpha * l_prev + p.sum(axis=-1, keepdims=True)
    acc_new = alpha * acc_prev + jnp.dot(
        p.astype(v_blk.dtype), v_blk, preferred_element_type=jnp.float32)
    return m_new, l_new, acc_new


def _flash_attn_head_kernel(q_ref, k_ref, v_ref, o_ref, m_sc, l_sc, acc_sc,
                            *, seq_len):
    """Head is a grid axis; q/k/v blocks are [1, T, Dh]. q is pre-scaled."""
    kv = pl.program_id(3)
    TQ = q_ref.shape[1]
    TK = k_ref.shape[1]

    @pl.when(kv == 0)
    def _init():
        m_sc[...] = jnp.full_like(m_sc, -jnp.inf)
        l_sc[...] = jnp.zeros_like(l_sc)
        acc_sc[...] = jnp.zeros_like(acc_sc)

    q = q_ref[0]          # [TQ, Dh], input dtype, already scaled by 1/sqrt(Dh)
    k = k_ref[0]          # [TK, Dh]
    v = v_ref[0]          # [TK, Dh]

    def step(k_blk, v_blk, col_valid):
        m, l, a = _online_softmax_step(q, k_blk, v_blk, col_valid,
                                       m_sc[...], l_sc[...], acc_sc[...])
        m_sc[...] = m
        l_sc[...] = l
        acc_sc[...] = a

    ragged_kv = (seq_len % TK) != 0                    # static Python bool
    if ragged_kv:
        is_last = kv == pl.num_programs(3) - 1

        @pl.when(is_last)                              # mask only last block
        def _masked_step():
            row_ok = (kv * TK + lax.broadcasted_iota(jnp.int32, (TK, 1), 0)
                      ) < seq_len
            col_ok = (kv * TK + lax.broadcasted_iota(jnp.int32, (TQ, TK), 1)
                      ) < seq_len
            step(jnp.where(row_ok, k, jnp.zeros_like(k)),
                 jnp.where(row_ok, v, jnp.zeros_like(v)), col_ok)

        @pl.when(jnp.logical_not(is_last))
        def _full_step():
            step(k, v, None)
    else:
        step(k, v, None)

    @pl.when(kv == pl.num_programs(3) - 1)
    def _finalize():
        o_ref[0] = (acc_sc[...] * pl.reciprocal(l_sc[...], approx=True)
                    ).astype(o_ref.dtype)


def _flash_attn_packed_kernel(q_ref, k_ref, v_ref, o_ref, m_sc, l_sc, acc_sc,
                              *, num_heads, seq_len):
    """Fallback for d_head % 128 != 0: heads stay packed in the lane dim and
    are sliced with a static loop inside the kernel. q is pre-scaled."""
    kv = pl.program_id(2)
    H = num_heads
    D = q_ref.shape[-1]
    Dh = D // H
    TQ = q_ref.shape[1]
    TK = k_ref.shape[1]

    @pl.when(kv == 0)
    def _init():
        m_sc[...] = jnp.full_like(m_sc, -jnp.inf)
        l_sc[...] = jnp.zeros_like(l_sc)
        acc_sc[...] = jnp.zeros_like(acc_sc)

    q = q_ref[0]
    k = k_ref[0]
    v = v_ref[0]

    def step(k_blk, v_blk, col_valid):
        # TODO(synk): sub-128-lane head slices; the head-axis grid kernel is
        # used instead whenever d_head is a multiple of 128.
        for h in range(H):
            sl = slice(h * Dh, (h + 1) * Dh)
            m, l, a = _online_softmax_step(q[:, sl], k_blk[:, sl],
                                           v_blk[:, sl], col_valid,
                                           m_sc[h], l_sc[h], acc_sc[h])
            m_sc[h] = m
            l_sc[h] = l
            acc_sc[h] = a

    ragged_kv = (seq_len % TK) != 0
    if ragged_kv:
        is_last = kv == pl.num_programs(2) - 1

        @pl.when(is_last)                              # mask only last block
        def _masked_step():
            row_ok = (kv * TK + lax.broadcasted_iota(jnp.int32, (TK, 1), 0)
                      ) < seq_len
            col_ok = (kv * TK + lax.broadcasted_iota(jnp.int32, (TQ, TK), 1)
                      ) < seq_len
            step(jnp.where(row_ok, k, jnp.zeros_like(k)),
                 jnp.where(row_ok, v, jnp.zeros_like(v)), col_ok)

        @pl.when(jnp.logical_not(is_last))
        def _full_step():
            step(k, v, None)
    else:
        step(k, v, None)

    @pl.when(kv == pl.num_programs(2) - 1)
    def _finalize():
        outs = [acc_sc[h] * pl.reciprocal(l_sc[h], approx=True)
                for h in range(H)]
        # Single lane-dense [TQ, D] store (heads re-merged in lane order).
        o_ref[0] = jnp.concatenate(outs, axis=-1).astype(o_ref.dtype)


def flash_attention(q, k, v, *, num_heads, block_q=None, block_k=None):
    """q, k, v: [B, S, D] with heads packed in D; q pre-scaled by 1/sqrt(Dh)."""
    B, S, D = q.shape
    assert D % num_heads == 0
    Dh = D // num_heads
    if block_q is None:
        block_q = _DEF_BLOCK_ATTN
    if block_k is None:
        block_k = _DEF_BLOCK_ATTN
    TQ = min(S, block_q)
    TK = min(S, block_k)

    head_on_grid = (Dh % 128 == 0) or (num_heads == 1)

    if head_on_grid:
        kernel = functools.partial(_flash_attn_head_kernel, seq_len=S)
        grid = (B, num_heads, pl.cdiv(S, TQ), pl.cdiv(S, TK))
        q_spec = pl.BlockSpec((1, TQ, Dh), lambda b, h, qi, kv: (b, qi, h))
        kv_spec = pl.BlockSpec((1, TK, Dh), lambda b, h, qi, kv: (b, kv, h))
        o_spec = pl.BlockSpec((1, TQ, Dh), lambda b, h, qi, kv: (b, qi, h))
        scratch = [pltpu.VMEM((TQ, 1), jnp.float32),
                   pltpu.VMEM((TQ, 1), jnp.float32),
                   pltpu.VMEM((TQ, Dh), jnp.float32)]
        dims = ("parallel", "parallel", "parallel", "arbitrary")
    else:
        kernel = functools.partial(_flash_attn_packed_kernel,
                                   num_heads=num_heads, seq_len=S)
        grid = (B, pl.cdiv(S, TQ), pl.cdiv(S, TK))
        q_spec = pl.BlockSpec((1, TQ, D), lambda b, qi, kv: (b, qi, 0))
        kv_spec = pl.BlockSpec((1, TK, D), lambda b, qi, kv: (b, kv, 0))
        o_spec = pl.BlockSpec((1, TQ, D), lambda b, qi, kv: (b, qi, 0))
        scratch = [pltpu.VMEM((num_heads, TQ, 1), jnp.float32),
                   pltpu.VMEM((num_heads, TQ, 1), jnp.float32),
                   pltpu.VMEM((num_heads, TQ, Dh), jnp.float32)]
        dims = ("parallel", "parallel", "arbitrary")

    return pl.pallas_call(
        kernel,
        out_shape=jax.ShapeDtypeStruct((B, S, D), q.dtype),
        grid=grid,
        in_specs=[q_spec, kv_spec, kv_spec],
        out_specs=o_spec,
        scratch_shapes=scratch,
        compiler_params=pltpu.CompilerParams(
            dimension_semantics=dims,
            vmem_limit_bytes=_VMEM_LIMIT),
    )(q, k, v)


# ----------------------------- module-level wrapper ---------------------------

def init_mha_params(key, d_model, num_heads, dtype=jnp.float32):
    assert d_model % num_heads == 0
    ks = jax.random.split(key, 8)

    def xavier(k, fan_in, fan_out):
        bound = (6.0 / (fan_in + fan_out)) ** 0.5
        return jax.random.uniform(k, (fan_in, fan_out), dtype, -bound, bound)

    def default_linear_w(k, fan_in, fan_out):
        bound = 1.0 / (fan_in ** 0.5)
        return jax.random.uniform(k, (fan_in, fan_out), dtype, -bound, bound)

    def default_bias(k, fan_in, fan_out):
        bound = 1.0 / (fan_in ** 0.5)
        return jax.random.uniform(k, (fan_out,), dtype, -bound, bound)

    D = d_model
    return {
        "q_w": xavier(ks[0], D, D), "q_b": default_bias(ks[1], D, D),
        "k_w": xavier(ks[2], D, D), "k_b": default_bias(ks[3], D, D),
        "v_w": xavier(ks[4], D, D), "v_b": default_bias(ks[5], D, D),
        "o_w": default_linear_w(ks[6], D, D), "o_b": default_bias(ks[7], D, D),
    }


def multi_head_attention_forward(params, query, num_heads, *,
                                 attn_block_q=None, attn_block_k=None):
    """Self-attention forward (key=value=None path, no masks, eval mode).
    TODO(synk): dropout (p=0 in eval), attn_mask/key_padding_mask and the
    return_weights path are not implemented."""
    B, S, D = query.shape
    d_head = D // num_heads
    scale = d_head ** (-0.5)

    x2d = query.reshape(B * S, D)
    # Scale folded into the Q projection epilogue.
    q2d, k2d, v2d = qkv_projection(
        x2d, params["q_w"], params["k_w"], params["v_w"],
        params["q_b"], params["k_b"], params["v_b"], q_scale=scale)

    # No split/merge-head transposes: activations stay [B, S, D]; heads are
    # DMA-sliced (grid axis) or lane-sliced inside the attention kernel.
    q = q2d.reshape(B, S, D)
    k = k2d.reshape(B, S, D)
    v = v2d.reshape(B, S, D)

    attn = flash_attention(q, k, v, num_heads=num_heads,
                           block_q=attn_block_q, block_k=attn_block_k)

    out = linear(attn.reshape(B * S, D), params["o_w"], params["o_b"])
    return out.reshape(B, S, D)


# ------------------------------ reference (jnp) -------------------------------

def reference_forward(params, query, num_heads):
    B, S, D = query.shape
    d_head = D // num_heads
    scale = d_head ** (-0.5)
    q = query.reshape(B * S, D) @ params["q_w"] + params["q_b"]
    k = query.reshape(B * S, D) @ params["k_w"] + params["k_b"]
    v = query.reshape(B * S, D) @ params["v_w"] + params["v_b"]

    def split(t):
        return t.reshape(B, S, num_heads, d_head).transpose(0, 2, 1, 3)

    qh, kh, vh = split(q), split(k), split(v)
    s = jnp.einsum("bhqd,bhkd->bhqk", qh, kh) * scale
    p = jax.nn.softmax(s, axis=-1)
    o = jnp.einsum("bhqk,bhkd->bhqd", p, vh)
    merged = o.transpose(0, 2, 1, 3).reshape(B * S, D)
    out = merged @ params["o_w"] + params["o_b"]
    return out.reshape(B, S, D)


if __name__ == "__main__":
    def check(B, S, D, H, dtype, tol, **kw):
        key = jax.random.PRNGKey(0)
        pkey, xkey = jax.random.split(key)
        params = init_mha_params(pkey, D, H, dtype=dtype)
        x = jax.random.normal(xkey, (B, S, D), dtype=jnp.float32).astype(dtype)
        out = jax.block_until_ready(
            multi_head_attention_forward(params, x, H, **kw))
        params32 = {name: p.astype(jnp.float32) for name, p in params.items()}
        ref = reference_forward(params32, x.astype(jnp.float32), H)
        assert out.shape == (B, S, D)
        assert jnp.allclose(out.astype(jnp.float32), ref, atol=tol, rtol=tol), (
            f"mismatch: B={B} S={S} D={D} H={H} dtype={dtype}")

    # Main small-shape check (packed-head path, single kv block).
    check(2, 8, 32, 4, jnp.float32, 2e-3)
    # Head-as-grid-axis path (d_head=128), ragged q/kv blocks, multiple kv steps.
    check(1, 24, 256, 2, jnp.float32, 2e-3, attn_block_q=16, attn_block_k=16)
    # Packed-head path with ragged kv masking and multiple kv steps.
    check(1, 24, 32, 4, jnp.float32, 2e-3, attn_block_q=16, attn_block_k=16)
    # bf16 activations/weights: MXU operands stay bf16, softmax math in f32.
    check(2, 8, 32, 4, jnp.bfloat16, 8e-2)

    # Standalone multi-block check of the K-accumulating projection kernel.
    k0, k1, k2 = jax.random.split(jax.random.PRNGKey(1), 3)
    xl = jax.random.normal(k0, (32, 256), jnp.float32)
    wl = jax.random.normal(k1, (256, 256), jnp.float32) * 0.05
    bl = jax.random.normal(k2, (256,), jnp.float32)
    yl = jax.block_until_ready(
        linear(xl, wl, bl, block_m=16, block_n=128, block_k=128))
    assert jnp.allclose(yl, xl @ wl + bl, atol=1e-3, rtol=1e-3)

    print("KERNEL_OK")
</pallas_src>

<mosaic_0001>
module attributes {stable_mosaic.version = 11 : i64} {
  func.func @_qkv_proj_kernel(%arg0: i32, %arg1: i32, %arg2: i32, %arg3: memref<16x32xf32, #tpu.memory_space<vmem>>, %arg4: memref<32x32xf32, #tpu.memory_space<vmem>>, %arg5: memref<32x32xf32, #tpu.memory_space<vmem>>, %arg6: memref<32x32xf32, #tpu.memory_space<vmem>>, %arg7: memref<1x32xf32, #tpu.memory_space<vmem>>, %arg8: memref<1x32xf32, #tpu.memory_space<vmem>>, %arg9: memref<1x32xf32, #tpu.memory_space<vmem>>, %arg10: memref<16x32xf32, #tpu.memory_space<vmem>>, %arg11: memref<16x32xf32, #tpu.memory_space<vmem>>, %arg12: memref<16x32xf32, #tpu.memory_space<vmem>>, %arg13: memref<16x32xf32, #tpu.memory_space<vmem>>, %arg14: memref<16x32xf32, #tpu.memory_space<vmem>>, %arg15: memref<16x32xf32, #tpu.memory_space<vmem>>) attributes {dimension_semantics = [#tpu.dimension_semantics<parallel>, #tpu.dimension_semantics<parallel>, #tpu.dimension_semantics<arbitrary>], iteration_bounds = array<i64: 1, 1, 1>, scalar_prefetch = 0 : i64, scratch_operands = 3 : i64, tpu.core_type = #tpu.core_type<tc>, window_params = [{transform_indices = @transform_0, window_bounds = array<i64: 16, 32>}, {transform_indices = @transform_1, window_bounds = array<i64: 32, 32>}, {transform_indices = @transform_2, window_bounds = array<i64: 32, 32>}, {transform_indices = @transform_3, window_bounds = array<i64: 32, 32>}, {transform_indices = @transform_4, window_bounds = array<i64: 1, 32>}, {transform_indices = @transform_5, window_bounds = array<i64: 1, 32>}, {transform_indices = @transform_6, window_bounds = array<i64: 1, 32>}, {transform_indices = @transform_7, window_bounds = array<i64: 16, 32>}, {transform_indices = @transform_8, window_bounds = array<i64: 16, 32>}, {transform_indices = @transform_9, window_bounds = array<i64: 16, 32>}]} {
    %c0_i32 = arith.constant 0 : i32
    %0 = arith.cmpi eq, %arg2, %c0_i32 : i32
    %1 = arith.extui %0 : i1 to i32
    %c0_i32_0 = arith.constant 0 : i32
    %2 = arith.cmpi ne, %1, %c0_i32_0 : i32
    scf.if %2 {
      %cst_24 = arith.constant 0.000000e+00 : f32
      %22 = vector.broadcast %cst_24 : f32 to vector<16x32xf32>
      %c0_25 = arith.constant 0 : index
      %c0_26 = arith.constant 0 : index
      %23 = vector.load %arg13[%c0_25, %c0_26] : memref<16x32xf32, #tpu.memory_space<vmem>>, vector<16x32xf32>
      tpu.vector_store %arg13[%c0_25, %c0_26], %22 {strides = array<i32>} : memref<16x32xf32, #tpu.memory_space<vmem>>, vector<16x32xf32>,
      %cst_27 = arith.constant 0.000000e+00 : f32
      %24 = vector.broadcast %cst_27 : f32 to vector<16x32xf32>
      %c0_28 = arith.constant 0 : index
      %c0_29 = arith.constant 0 : index
      %25 = vector.load %arg14[%c0_28, %c0_29] : memref<16x32xf32, #tpu.memory_space<vmem>>, vector<16x32xf32>
      tpu.vector_store %arg14[%c0_28, %c0_29], %24 {strides = array<i32>} : memref<16x32xf32, #tpu.memory_space<vmem>>, vector<16x32xf32>,
      %cst_30 = arith.constant 0.000000e+00 : f32
      %26 = vector.broadcast %cst_30 : f32 to vector<16x32xf32>
      %c0_31 = arith.constant 0 : index
      %c0_32 = arith.constant 0 : index
      %27 = vector.load %arg15[%c0_31, %c0_32] : memref<16x32xf32, #tpu.memory_space<vmem>>, vector<16x32xf32>
      tpu.vector_store %arg15[%c0_31, %c0_32], %26 {strides = array<i32>} : memref<16x32xf32, #tpu.memory_space<vmem>>, vector<16x32xf32>,
    } else {
    }
    %c0 = arith.constant 0 : index
    %c0_1 = arith.constant 0 : index
    %3 = vector.load %arg3[%c0, %c0_1] : memref<16x32xf32, #tpu.memory_space<vmem>>, vector<16x32xf32>
    %c0_2 = arith.constant 0 : index
    %c0_3 = arith.constant 0 : index
    %4 = vector.load %arg13[%c0_2, %c0_3] : memref<16x32xf32, #tpu.memory_space<vmem>>, vector<16x32xf32>
    %c0_4 = arith.constant 0 : index
    %c0_5 = arith.constant 0 : index
    %5 = vector.load %arg4[%c0_4, %c0_5] : memref<32x32xf32, #tpu.memory_space<vmem>>, vector<32x32xf32>
    %cst = arith.constant dense<0.000000e+00> : vector<16x32xf32>
    %6 = tpu.matmul %3, %5, %cst {dimension_numbers = #tpu.dot_dimension_numbers<[1], [0], [0], [1], [0, 0, 1, 1], [], []>} : vector<16x32xf32>, vector<32x32xf32>, vector<16x32xf32> -> vector<16x32xf32>
    %7 = arith.addf %4, %6 : vector<16x32xf32>
    %c0_6 = arith.constant 0 : index
    %c0_7 = arith.constant 0 : index
    %8 = vector.load %arg13[%c0_6, %c0_7] : memref<16x32xf32, #tpu.memory_space<vmem>>, vector<16x32xf32>
    tpu.vector_store %arg13[%c0_6, %c0_7], %7 {strides = array<i32>} : memref<16x32xf32, #tpu.memory_space<vmem>>, vector<16x32xf32>,
    %c0_8 = arith.constant 0 : index
    %c0_9 = arith.constant 0 : index
    %9 = vector.load %arg14[%c0_8, %c0_9] : memref<16x32xf32, #tpu.memory_space<vmem>>, vector<16x32xf32>
    %c0_10 = arith.constant 0 : index
    %c0_11 = arith.constant 0 : index
    %10 = vector.load %arg5[%c0_10, %c0_11] : memref<32x32xf32, #tpu.memory_space<vmem>>, vector<32x32xf32>
    %cst_12 = arith.constant dense<0.000000e+00> : vector<16x32xf32>
    %11 = tpu.matmul %3, %10, %cst_12 {dimension_numbers = #tpu.dot_dimension_numbers<[1], [0], [0], [1], [0, 0, 1, 1], [], []>} : vector<16x32xf32>, vector<32x32xf32>, vector<16x32xf32> -> vector<16x32xf32>
    %12 = arith.addf %9, %11 : vector<16x32xf32>
    %c0_13 = arith.constant 0 : index
    %c0_14 = arith.constant 0 : index
    %13 = vector.load %arg14[%c0_13, %c0_14] : memref<16x32xf32, #tpu.memory_space<vmem>>, vector<16x32xf32>
    tpu.vector_store %arg14[%c0_13, %c0_14], %12 {strides = array<i32>} : memref<16x32xf32, #tpu.memory_space<vmem>>, vector<16x32xf32>,
    %c0_15 = arith.constant 0 : index
    %c0_16 = arith.constant 0 : index
    %14 = vector.load %arg15[%c0_15, %c0_16] : memref<16x32xf32, #tpu.memory_space<vmem>>, vector<16x32xf32>
    %c0_17 = arith.constant 0 : index
    %c0_18 = arith.constant 0 : index
    %15 = vector.load %arg6[%c0_17, %c0_18] : memref<32x32xf32, #tpu.memory_space<vmem>>, vector<32x32xf32>
    %cst_19 = arith.constant dense<0.000000e+00> : vector<16x32xf32>
    %16 = tpu.matmul %3, %15, %cst_19 {dimension_numbers = #tpu.dot_dimension_numbers<[1], [0], [0], [1], [0, 0, 1, 1], [], []>} : vector<16x32xf32>, vector<32x32xf32>, vector<16x32xf32> -> vector<16x32xf32>
    %17 = arith.addf %14, %16 : vector<16x32xf32>
    %c0_20 = arith.constant 0 : index
    %c0_21 = arith.constant 0 : index
    %18 = vector.load %arg15[%c0_20, %c0_21] : memref<16x32xf32, #tpu.memory_space<vmem>>, vector<16x32xf32>
    tpu.vector_store %arg15[%c0_20, %c0_21], %17 {strides = array<i32>} : memref<16x32xf32, #tpu.memory_space<vmem>>, vector<16x32xf32>,
    %c0_i32_22 = arith.constant 0 : i32
    %19 = arith.cmpi eq, %arg2, %c0_i32_22 : i32
    %20 = arith.extui %19 : i1 to i32
    %c0_i32_23 = arith.constant 0 : i32
    %21 = arith.cmpi ne, %20, %c0_i32_23 : i32
    scf.if %21 {
      %c0_24 = arith.constant 0 : index
      %c0_25 = arith.constant 0 : index
      %22 = vector.load %arg13[%c0_24, %c0_25] : memref<16x32xf32, #tpu.memory_space<vmem>>, vector<16x32xf32>
      %c0_26 = arith.constant 0 : index
      %c0_27 = arith.constant 0 : index
      %23 = vector.load %arg7[%c0_26, %c0_27] : memref<1x32xf32, #tpu.memory_space<vmem>>, vector<1x32xf32>
      %24 = vector.broadcast %23 : vector<1x32xf32> to vector<16x32xf32>
      %25 = arith.addf %22, %24 : vector<16x32xf32>
      %cst_28 = arith.constant 0.353553385 : f32
      %26 = vector.broadcast %cst_28 : f32 to vector<16x32xf32>
      %27 = arith.mulf %25, %26 : vector<16x32xf32>
      %c0_29 = arith.constant 0 : index
      %c0_30 = arith.constant 0 : index
      %28 = vector.load %arg10[%c0_29, %c0_30] : memref<16x32xf32, #tpu.memory_space<vmem>>, vector<16x32xf32>
      tpu.vector_store %arg10[%c0_29, %c0_30], %27 {strides = array<i32>} : memref<16x32xf32, #tpu.memory_space<vmem>>, vector<16x32xf32>,
      %c0_31 = arith.constant 0 : index
      %c0_32 = arith.constant 0 : index
      %29 = vector.load %arg14[%c0_31, %c0_32] : memref<16x32xf32, #tpu.memory_space<vmem>>, vector<16x32xf32>
      %c0_33 = arith.constant 0 : index
      %c0_34 = arith.constant 0 : index
      %30 = vector.load %arg8[%c0_33, %c0_34] : memref<1x32xf32, #tpu.memory_space<vmem>>, vector<1x32xf32>
      %31 = vector.broadcast %30 : vector<1x32xf32> to vector<16x32xf32>
      %32 = arith.addf %29, %31 : vector<16x32xf32>
      %c0_35 = arith.constant 0 : index
      %c0_36 = arith.constant 0 : index
      %33 = vector.load %arg11[%c0_35, %c0_36] : memref<16x32xf32, #tpu.memory_space<vmem>>, vector<16x32xf32>
      tpu.vector_store %arg11[%c0_35, %c0_36], %32 {strides = array<i32>} : memref<16x32xf32, #tpu.memory_space<vmem>>, vector<16x32xf32>,
      %c0_37 = arith.constant 0 : index
      %c0_38 = arith.constant 0 : index
      %34 = vector.load %arg15[%c0_37, %c0_38] : memref<16x32xf32, #tpu.memory_space<vmem>>, vector<16x32xf32>
      %c0_39 = arith.constant 0 : index
      %c0_40 = arith.constant 0 : index
      %35 = vector.load %arg9[%c0_39, %c0_40] : memref<1x32xf32, #tpu.memory_space<vmem>>, vector<1x32xf32>
      %36 = vector.broadcast %35 : vector<1x32xf32> to vector<16x32xf32>
      %37 = arith.addf %34, %36 : vector<16x32xf32>
      %c0_41 = arith.constant 0 : index
      %c0_42 = arith.constant 0 : index
      %38 = vector.load %arg12[%c0_41, %c0_42] : memref<16x32xf32, #tpu.memory_space<vmem>>, vector<16x32xf32>
      tpu.vector_store %arg12[%c0_41, %c0_42], %37 {strides = array<i32>} : memref<16x32xf32, #tpu.memory_space<vmem>>, vector<16x32xf32>,
    } else {
    }
    return
  }
  func.func @transform_0(%arg0: i32, %arg1: i32, %arg2: i32) -> (i32, i32) {
    %c0_i32 = arith.constant 0 : i32
    return %arg1, %arg2 : i32, i32
  }
  func.func @transform_1(%arg0: i32, %arg1: i32, %arg2: i32) -> (i32, i32) {
    %c0_i32 = arith.constant 0 : i32
    return %arg2, %arg0 : i32, i32
  }
  func.func @transform_2(%arg0: i32, %arg1: i32, %arg2: i32) -> (i32, i32) {
    %c0_i32 = arith.constant 0 : i32
    return %arg2, %arg0 : i32, i32
  }
  func.func @transform_3(%arg0: i32, %arg1: i32, %arg2: i32) -> (i32, i32) {
    %c0_i32 = arith.constant 0 : i32
    return %arg2, %arg0 : i32, i32
  }
  func.func @transform_4(%arg0: i32, %arg1: i32, %arg2: i32) -> (i32, i32) {
    %c0_i32 = arith.constant 0 : i32
    %c0_i32_0 = arith.constant 0 : i32
    return %c0_i32, %arg0 : i32, i32
  }
  func.func @transform_5(%arg0: i32, %arg1: i32, %arg2: i32) -> (i32, i32) {
    %c0_i32 = arith.constant 0 : i32
    %c0_i32_0 = arith.constant 0 : i32
    return %c0_i32, %arg0 : i32, i32
  }
  func.func @transform_6(%arg0: i32, %arg1: i32, %arg2: i32) -> (i32, i32) {
    %c0_i32 = arith.constant 0 : i32
    %c0_i32_0 = arith.constant 0 : i32
    return %c0_i32, %arg0 : i32, i32
  }
  func.func @transform_7(%arg0: i32, %arg1: i32, %arg2: i32) -> (i32, i32) {
    %c0_i32 = arith.constant 0 : i32
    return %arg1, %arg0 : i32, i32
  }
  func.func @transform_8(%arg0: i32, %arg1: i32, %arg2: i32) -> (i32, i32) {
    %c0_i32 = arith.constant 0 : i32
    return %arg1, %arg0 : i32, i32
  }
  func.func @transform_9(%arg0: i32, %arg1: i32, %arg2: i32) -> (i32, i32) {
    %c0_i32 = arith.constant 0 : i32
    return %arg1, %arg0 : i32, i32
  }
}

</mosaic_0001>

<llo_original>
// kernel: tpu_custom_call.1
$region0: #{tpu_custom_call.1}
  #allocation0 [shape = 'u32[]', space=smem, size = 0x4, offset = 0x4, fixed_abs, tag = 'smem constant byte address 0x4 - core index']
  #allocation1 [shape = 'u32[144,128]{1,0:T(1,128)}', space=vmem, size = 0x12000, scoped, tag = 'internal scratch']
  #allocation2 [shape = 'f32[16,32]{1,0:T(8,128)}', space=vmem, size = 0x2000, scoped, tag = 'scratch operand']
  #allocation3 [shape = 'f32[16,32]{1,0:T(8,128)}', space=vmem, size = 0x2000, scoped, tag = 'scratch operand']
  #allocation4 [shape = 'f32[16,32]{1,0:T(8,128)}', space=vmem, size = 0x2000, scoped, tag = 'scratch operand']
  %s0 = inlined_call_operand.hbm [shape: f32[16,32], index: 0, kind: input, shape index: {}]
  %s1 = inlined_call_operand.hbm [shape: f32[32,32], index: 1, kind: input, shape index: {}]
  %s2 = inlined_call_operand.hbm [shape: f32[32,32], index: 2, kind: input, shape index: {}]
  %s3 = inlined_call_operand.hbm [shape: f32[32,32], index: 3, kind: input, shape index: {}]
  %s4 = inlined_call_operand.vmem [shape: f32[1,32], index: 4, kind: input, shape index: {}]
  %s5 = inlined_call_operand.vmem [shape: f32[1,32], index: 5, kind: input, shape index: {}]
  %s6 = inlined_call_operand.vmem [shape: f32[1,32], index: 6, kind: input, shape index: {}]
  %s7 = inlined_call_operand.hbm [shape: f32[16,32], index: 7, kind: output, shape index: {0}]
  %s8 = inlined_call_operand.hbm [shape: f32[16,32], index: 8, kind: output, shape index: {1}]
  %s9 = inlined_call_operand.hbm [shape: f32[16,32], index: 9, kind: output, shape index: {2}]
  %10 = xla_tuple %s7, %s8, %s9
  %s11 = sld [smem:[#allocation0]]
  $region78: #{tpu_custom_call.1} parent=0
    _
  %s13 = ssub.s32 1, %s11
  %s14 = scalar_select 0, %s13, %s11
  $region1: #{tpu_custom_call.1} parent=0
    #allocation5 [shape = 'u8[8192]{0}', space=vmem, size = 0x2000, scoped, tag = 'input window, operand 0, single buffered']
    #allocation6 [shape = 's32[1]{0}', space=sflag, size = 0x4, scoped, tag = 'scoped memory for tpu_custom_call.1']
    #allocation7 [shape = 's32[1]{0}', space=sflag, size = 0x4, scoped, tag = 'scoped memory for tpu_custom_call.1']
    #allocation8 [shape = 'u8[16384]{0}', space=vmem, size = 0x4000, scoped, tag = 'input window, operand 1, single buffered']
    #allocation9 [shape = 's32[1]{0}', space=sflag, size = 0x4, scoped, tag = 'scoped memory for tpu_custom_call.1']
    #allocation10 [shape = 'u8[16384]{0}', space=vmem, size = 0x4000, scoped, tag = 'input window, operand 2, single buffered']
    #allocation11 [shape = 'u8[16384]{0}', space=vmem, size = 0x4000, scoped, tag = 'input window, operand 3, single buffered']
    #allocation12 [shape = 's32[1]{0}', space=sflag, size = 0x4, scoped, tag = 'scoped memory for tpu_custom_call.1']
    #allocation13 [shape = 'u8[8192]{0}', space=vmem, size = 0x2000, scoped, tag = 'output window, operand 0, single buffered']
    #allocation14 [shape = 'u8[8192]{0}', space=vmem, size = 0x2000, scoped, tag = 'output window, operand 1, single buffered']
    #allocation15 [shape = 's32[1]{0}', space=sflag, size = 0x4, scoped, tag = 'scoped memory for tpu_custom_call.1']
    #allocation16 [shape = 'u8[8192]{0}', space=vmem, size = 0x2000, scoped, tag = 'output window, operand 2, single buffered']
    %15 = vsyncpa [#allocation6], 0
    %16 = vsyncpa [#allocation9], 0
    %17 = vsyncpa [#allocation12], 0
    %18 = vsyncpa [#allocation7], 0
    %19 = vsyncpa [#allocation15], 0
    // Predicated region
    $region2: #{tpu_custom_call.1} parent=1 // pred_check
      _
    $region3: #{tpu_custom_call.1} parent=1 // pred_check_branch
      %21 = sbr.rel (0) target = $region5
    $region4: #{tpu_custom_call.1} parent=1 // pred_region
      %s23 = ssub.s32 256, 256
      %24 = vsyncadd [#allocation6], %s23
      %s25 = sshll.u32 [#allocation5], 4
      %s26 = int_to_ptr.vmem [resolvable:$true] %s25
      %31 = dma.hbm_to_vmem [thread:$0]  %s0, 256, %s26, [#allocation6], 128, 128, 8
    $region5: #{tpu_custom_call.1} parent=1 // pred_fallthru
      _
    // Predicated region
    $region6: #{tpu_custom_call.1} parent=1 // pred_check
      _
    $region7: #{tpu_custom_call.1} parent=1 // pred_check_branch
      %33 = sbr.rel (0) target = $region9
    $region8: #{tpu_custom_call.1} parent=1 // pred_region
      %s35 = ssub.s32 512, 512
      %36 = vsyncadd [#allocation9], %s35
      %s37 = sshll.u32 [#allocation8], 4
      %s38 = int_to_ptr.vmem [resolvable:$true] %s37
      %43 = dma.hbm_to_vmem [thread:$0]  %s1, 512, %s38, [#allocation9], 128, 128, 8
    $region9: #{tpu_custom_call.1} parent=1 // pred_fallthru
      _
    // Predicated region
    $region10: #{tpu_custom_call.1} parent=1 // pred_check
      _
    $region11: #{tpu_custom_call.1} parent=1 // pred_check_branch
      %45 = sbr.rel (0) target = $region13
    $region12: #{tpu_custom_call.1} parent=1 // pred_region
      %s47 = ssub.s32 512, 512
      %48 = vsyncadd [#allocation9], %s47
      %s49 = sshll.u32 [#allocation10], 4
      %s50 = int_to_ptr.vmem [resolvable:$true] %s49
      %55 = dma.hbm_to_vmem [thread:$0]  %s2, 512, %s50, [#allocation9], 128, 128, 8
    $region13: #{tpu_custom_call.1} parent=1 // pred_fallthru
      _
    // Predicated region
    $region14: #{tpu_custom_call.1} parent=1 // pred_check
      _
    $region15: #{tpu_custom_call.1} parent=1 // pred_check_branch
      %57 = sbr.rel (0) target = $region17
    $region16: #{tpu_custom_call.1} parent=1 // pred_region
      %s59 = ssub.s32 512, 512
      %60 = vsyncadd [#allocation12], %s59
      %s61 = sshll.u32 [#allocation11], 4
      %s62 = int_to_ptr.vmem [resolvable:$true] %s61
      %67 = dma.hbm_to_vmem [thread:$0]  %s3, 512, %s62, [#allocation12], 128, 128, 8
    $region17: #{tpu_custom_call.1} parent=1 // pred_fallthru
      _
    // Predicated region
    $region18: #{tpu_custom_call.1} parent=1 // pred_check
      _
    $region19: #{tpu_custom_call.1} parent=1 // pred_check_branch
      %69 = sbr.rel (0) target = $region21
    $region20: #{tpu_custom_call.1} parent=1 // pred_region
      _
    $region21: #{tpu_custom_call.1} parent=1 // pred_fallthru
      _
    // Predicated region
    $region22: #{tpu_custom_call.1} parent=1 // pred_check
      _
    $region23: #{tpu_custom_call.1} parent=1 // pred_check_branch
      %71 = sbr.rel (0) target = $region25
    $region24: #{tpu_custom_call.1} parent=1 // pred_region
      _
    $region25: #{tpu_custom_call.1} parent=1 // pred_fallthru
      _
    // Predicated region
    $region26: #{tpu_custom_call.1} parent=1 // pred_check
      _
    $region27: #{tpu_custom_call.1} parent=1 // pred_check_branch
      %73 = sbr.rel (0) target = $region29
    $region28: #{tpu_custom_call.1} parent=1 // pred_region
      _
    $region29: #{tpu_custom_call.1} parent=1 // pred_fallthru
      _
    // Predicated region
    $region30: #{tpu_custom_call.1} parent=1 // pred_check
      _
    $region31: #{tpu_custom_call.1} parent=1 // pred_check_branch
      %75 = sbr.rel (0) target = $region33
    $region32: #{tpu_custom_call.1} parent=1 // pred_region
      %76 = dma.done [#allocation6], 256
    $region33: #{tpu_custom_call.1} parent=1 // pred_fallthru
      _
    // Predicated region
    $region34: #{tpu_custom_call.1} parent=1 // pred_check
      _
    $region35: #{tpu_custom_call.1} parent=1 // pred_check_branch
      %78 = sbr.rel (0) target = $region37
    $region36: #{tpu_custom_call.1} parent=1 // pred_region
      %79 = dma.done [#allocation9], 512
    $region37: #{tpu_custom_call.1} parent=1 // pred_fallthru
      _
    // Predicated region
    $region38: #{tpu_custom_call.1} parent=1 // pred_check
      _
    $region39: #{tpu_custom_call.1} parent=1 // pred_check_branch
      %81 = sbr.rel (0) target = $region41
    $region40: #{tpu_custom_call.1} parent=1 // pred_region
      %82 = dma.done [#allocation9], 512
    $region41: #{tpu_custom_call.1} parent=1 // pred_fallthru
      _
    // Predicated region
    $region42: #{tpu_custom_call.1} parent=1 // pred_check
      _
    $region43: #{tpu_custom_call.1} parent=1 // pred_check_branch
      %84 = sbr.rel (0) target = $region45
    $region44: #{tpu_custom_call.1} parent=1 // pred_region
      %85 = dma.done [#allocation12], 512
    $region45: #{tpu_custom_call.1} parent=1 // pred_fallthru
      _
    %p86 = scmp.eq.s32.totalorder 0, 0
    // Predicated region
    $region46: #{tpu_custom_call.1} parent=1 // pred_check
      %p87 = pneg %p86
    $region47: #{tpu_custom_call.1} parent=1 // pred_check_branch
      %89 = sbr.rel (%p87) target = $region49
    $region48: #{tpu_custom_call.1} parent=1 // pred_region
      %vm90 = vcmask 261120
      %91 = vst.msk [vmem:[#allocation2] sm:$0xff] %vm90, 0.0
      %92 = vst.msk [vmem:[#allocation2 + $0x8] sm:$0xff] %vm90, 0.0
      %93 = vst.msk [vmem:[#allocation3] sm:$0xff] %vm90, 0.0
      %94 = vst.msk [vmem:[#allocation3 + $0x8] sm:$0xff] %vm90, 0.0
      %95 = vst.msk [vmem:[#allocation4] sm:$0xff] %vm90, 0.0
      %96 = vst.msk [vmem:[#allocation4 + $0x8] sm:$0xff] %vm90, 0.0
    $region49: #{tpu_custom_call.1} parent=1 // pred_fallthru
      _
    %v97 = vld [vmem:[#allocation5] sm:$0xff]
    %v98 = vld [vmem:[#allocation5 + $0x8] sm:$0xff]
    %v99 = vld [vmem:[#allocation2] sm:$0xff]
    %v100 = vld [vmem:[#allocation2 + $0x8] sm:$0xff]
    %v101 = vld [vmem:[#allocation8] sm:$0xff]
    %v102 = vld [vmem:[#allocation8 + $0x8] sm:$0xff]
    %v103 = vld [vmem:[#allocation8 + $0x10] sm:$0xff]
    %v104 = vld [vmem:[#allocation8 + $0x18] sm:$0xff]
    %vm105 = vcmask 261120
    %v107 = vsel %vm105, %v97, 0
    %v110 = vsel %vm105, %v98, 0
    %112 = vmatprep.subr.mxu0 0.0
    %113 = vmatpush1.msra.mxu0 0.0
    %114 = vmatprep.subr.mxu0 0.0
    %115 = vmatpush1.msra.mxu0 0.0
    %116 = vmatprep.subr.mxu0 0.0
    %117 = vmatpush1.msra.mxu0 0.0
    %118 = vmatprep.subr.mxu0 0.0
    %119 = vmatpush1.msra.mxu0 0.0
    %120 = vmatprep.subr.mxu0 0.0
    %121 = vmatpush1.msra.mxu0 0.0
    %122 = vmatprep.subr.mxu0 0.0
    %123 = vmatpush1.msra.mxu0 0.0
    %124 = vmatprep.subr.mxu0 0.0
    %125 = vmatpush1.msra.mxu0 0.0
    %126 = vmatprep.subr.mxu0 0.0
    %127 = vmatpush1.msra.mxu0 0.0
    %128 = vmatprep.subr.mxu0 0.0
    %129 = vmatpush1.msra.mxu0 0.0
    %130 = vmatprep.subr.mxu0 0.0
    %131 = vmatpush1.msra.mxu0 0.0
    %132 = vmatprep.subr.mxu0 0.0
    %133 = vmatpush1.msra.mxu0 0.0
    %134 = vmatprep.subr.mxu0 0.0
    %135 = vmatpush1.msra.mxu0 0.0
    %136 = vmatprep.subr.mxu0 0.0
    %137 = vmatpush1.msra.mxu0 %v104
    %138 = vmatprep.subr.mxu0 0.0
    %139 = vmatpush1.msra.mxu0 %v103
    %140 = vmatprep.subr.mxu0 0.0
    %141 = vmatpush1.msra.mxu0 %v102
    %142 = vmatprep.subr.mxu0 0.0
    %143 = vmatpush1.msra.mxu0 %v101
    %144 = vmatprep.subr.mxu0 0.0
    %145 = vmatpush2.msra.mxu0 0.0
    %146 = vmatprep.subr.mxu0 0.0
    %147 = vmatpush2.msra.mxu0 0.0
    %148 = vmatprep.subr.mxu0 0.0
    %149 = vmatpush2.msra.mxu0 0.0
    %150 = vmatprep.subr.mxu0 0.0
    %151 = vmatpush2.msra.mxu0 0.0
    %152 = vmatprep.subr.mxu0 0.0
    %153 = vmatpush2.msra.mxu0 0.0
    %154 = vmatprep.subr.mxu0 0.0
    %155 = vmatpush2.msra.mxu0 0.0
    %156 = vmatprep.subr.mxu0 0.0
    %157 = vmatpush2.msra.mxu0 0.0
    %158 = vmatprep.subr.mxu0 0.0
    %159 = vmatpush2.msra.mxu0 0.0
    %160 = vmatprep.subr.mxu0 0.0
    %161 = vmatpush2.msra.mxu0 0.0
    %162 = vmatprep.subr.mxu0 0.0
    %163 = vmatpush2.msra.mxu0 0.0
    %164 = vmatprep.subr.mxu0 0.0
    %165 = vmatpush2.msra.mxu0 0.0
    %166 = vmatprep.subr.mxu0 0.0
    %167 = vmatpush2.msra.mxu0 0.0
    %168 = vmatprep.subr.mxu0 0.0
    %169 = vmatpush2.msra.mxu0 0.0
    %170 = vmatprep.subr.mxu0 0.0
    %171 = vmatpush2.msra.mxu0 0.0
    %172 = vmatprep.subr.mxu0 0.0
    %173 = vmatpush2.msra.mxu0 0.0
    %174 = vmatprep.subr.mxu0 0.0
    %175 = vmatpush2.msra.mxu0 0.0
    %176 = vmatprep.mubr.f32.mxu0 0.0
    %177 = vmatmul.mubr.f32.gmra.mxu0 %v107
    %v178 = vpop.f32.mrf.mxu0
    %v179 = vadd.f32 0.0, %v178
    %v180 = vpop.f32.mrf.mxu0
    %181 = vmatprep.mubr.f32.mxu0 0.0
    %182 = vmatmul.mubr.f32.gmra.mxu0 %v110
    %v183 = vpop.f32.mrf.mxu0
    %v184 = vadd.f32 0.0, %v183
    %v185 = vpop.f32.mrf.mxu0
    %186 = vdwg.mxu0
    %v187 = vadd.f32 %v99, %v179
    %v188 = vadd.f32 %v100, %v184
    %189 = vst.msk [vmem:[#allocation2] sm:$0xff] %vm105, %v187
    %190 = vst.msk [vmem:[#allocation2 + $0x8] sm:$0xff] %vm105, %v188
    %v191 = vld [vmem:[#allocation3] sm:$0xff]
    %v192 = vld [vmem:[#allocation3 + $0x8] sm:$0xff]
    %v193 = vld [vmem:[#allocation10] sm:$0xff]
    %v194 = vld [vmem:[#allocation10 + $0x8] sm:$0xff]
    %v195 = vld [vmem:[#allocation10 + $0x10] sm:$0xff]
    %v196 = vld [vmem:[#allocation10 + $0x18] sm:$0xff]
    %197 = vmatprep.subr.mxu0 0.0
    %198 = vmatpush1.msra.mxu0 0.0
    %199 = vmatprep.subr.mxu0 0.0
    %200 = vmatpush1.msra.mxu0 0.0
    %201 = vmatprep.subr.mxu0 0.0
    %202 = vmatpush1.msra.mxu0 0.0
    %203 = vmatprep.subr.mxu0 0.0
    %204 = vmatpush1.msra.mxu0 0.0
    %205 = vmatprep.subr.mxu0 0.0
    %206 = vmatpush1.msra.mxu0 0.0
    %207 = vmatprep.subr.mxu0 0.0
    %208 = vmatpush1.msra.mxu0 0.0
    %209 = vmatprep.subr.mxu0 0.0
    %210 = vmatpush1.msra.mxu0 0.0
    %211 = vmatprep.subr.mxu0 0.0
    %212 = vmatpush1.msra.mxu0 0.0
    %213 = vmatprep.subr.mxu0 0.0
    %214 = vmatpush1.msra.mxu0 0.0
    %215 = vmatprep.subr.mxu0 0.0
    %216 = vmatpush1.msra.mxu0 0.0
    %217 = vmatprep.subr.mxu0 0.0
    %218 = vmatpush1.msra.mxu0 0.0
    %219 = vmatprep.subr.mxu0 0.0
    %220 = vmatpush1.msra.mxu0 0.0
    %221 = vmatprep.subr.mxu0 0.0
    %222 = vmatpush1.msra.mxu0 %v196
    %223 = vmatprep.subr.mxu0 0.0
    %224 = vmatpush1.msra.mxu0 %v195
    %225 = vmatprep.subr.mxu0 0.0
    %226 = vmatpush1.msra.mxu0 %v194
    %227 = vmatprep.subr.mxu0 0.0
    %228 = vmatpush1.msra.mxu0 %v193
    %229 = vmatprep.subr.mxu0 0.0
    %230 = vmatpush2.msra.mxu0 0.0
    %231 = vmatprep.subr.mxu0 0.0
    %232 = vmatpush2.msra.mxu0 0.0
    %233 = vmatprep.subr.mxu0 0.0
    %234 = vmatpush2.msra.mxu0 0.0
    %235 = vmatprep.subr.mxu0 0.0
    %236 = vmatpush2.msra.mxu0 0.0
    %237 = vmatprep.subr.mxu0 0.0
    %238 = vmatpush2.msra.mxu0 0.0
    %239 = vmatprep.subr.mxu0 0.0
    %240 = vmatpush2.msra.mxu0 0.0
    %241 = vmatprep.subr.mxu0 0.0
    %242 = vmatpush2.msra.mxu0 0.0
    %243 = vmatprep.subr.mxu0 0.0
    %244 = vmatpush2.msra.mxu0 0.0
    %245 = vmatprep.subr.mxu0 0.0
    %246 = vmatpush2.msra.mxu0 0.0
    %247 = vmatprep.subr.mxu0 0.0
    %248 = vmatpush2.msra.mxu0 0.0
    %249 = vmatprep.subr.mxu0 0.0
    %250 = vmatpush2.msra.mxu0 0.0
    %251 = vmatprep.subr.mxu0 0.0
    %252 = vmatpush2.msra.mxu0 0.0
    %253 = vmatprep.subr.mxu0 0.0
    %254 = vmatpush2.msra.mxu0 0.0
    %255 = vmatprep.subr.mxu0 0.0
    %256 = vmatpush2.msra.mxu0 0.0
    %257 = vmatprep.subr.mxu0 0.0
    %258 = vmatpush2.msra.mxu0 0.0
    %259 = vmatprep.subr.mxu0 0.0
    %260 = vmatpush2.msra.mxu0 0.0
    %261 = vmatprep.mubr.f32.mxu0 0.0
    %262 = vmatmul.mubr.f32.gmra.mxu0 %v107
    %v263 = vpop.f32.mrf.mxu0
    %v264 = vadd.f32 0.0, %v263
    %v265 = vpop.f32.mrf.mxu0
    %266 = vmatprep.mubr.f32.mxu0 0.0
    %267 = vmatmul.mubr.f32.gmra.mxu0 %v110
    %v268 = vpop.f32.mrf.mxu0
    %v269 = vadd.f32 0.0, %v268
    %v270 = vpop.f32.mrf.mxu0
    %271 = vdwg.mxu0
    %v272 = vadd.f32 %v191, %v264
    %v273 = vadd.f32 %v192, %v269
    %274 = vst.msk [vmem:[#allocation3] sm:$0xff] %vm105, %v272
    %275 = vst.msk [vmem:[#allocation3 + $0x8] sm:$0xff] %vm105, %v273
    %v276 = vld [vmem:[#allocation4] sm:$0xff]
    %v277 = vld [vmem:[#allocation4 + $0x8] sm:$0xff]
    %v278 = vld [vmem:[#allocation11] sm:$0xff]
    %v279 = vld [vmem:[#allocation11 + $0x8] sm:$0xff]
    %v280 = vld [vmem:[#allocation11 + $0x10] sm:$0xff]
    %v281 = vld [vmem:[#allocation11 + $0x18] sm:$0xff]
    %282 = vmatprep.subr.mxu0 0.0
    %283 = vmatpush1.msra.mxu0 0.0
    %284 = vmatprep.subr.mxu0 0.0
    %285 = vmatpush1.msra.mxu0 0.0
    %286 = vmatprep.subr.mxu0 0.0
    %287 = vmatpush1.msra.mxu0 0.0
    %288 = vmatprep.subr.mxu0 0.0
    %289 = vmatpush1.msra.mxu0 0.0
    %290 = vmatprep.subr.mxu0 0.0
    %291 = vmatpush1.msra.mxu0 0.0
    %292 = vmatprep.subr.mxu0 0.0
    %293 = vmatpush1.msra.mxu0 0.0
    %294 = vmatprep.subr.mxu0 0.0
    %295 = vmatpush1.msra.mxu0 0.0
    %296 = vmatprep.subr.mxu0 0.0
    %297 = vmatpush1.msra.mxu0 0.0
    %298 = vmatprep.subr.mxu0 0.0
    %299 = vmatpush1.msra.mxu0 0.0
    %300 = vmatprep.subr.mxu0 0.0
    %301 = vmatpush1.msra.mxu0 0.0
    %302 = vmatprep.subr.mxu0 0.0
    %303 = vmatpush1.msra.mxu0 0.0
    %304 = vmatprep.subr.mxu0 0.0
    %305 = vmatpush1.msra.mxu0 0.0
    %306 = vmatprep.subr.mxu0 0.0
    %307 = vmatpush1.msra.mxu0 %v281
    %308 = vmatprep.subr.mxu0 0.0
    %309 = vmatpush1.msra.mxu0 %v280
    %310 = vmatprep.subr.mxu0 0.0
    %311 = vmatpush1.msra.mxu0 %v279
    %312 = vmatprep.subr.mxu0 0.0
    %313 = vmatpush1.msra.mxu0 %v278
    %314 = vmatprep.subr.mxu0 0.0
    %315 = vmatpush2.msra.mxu0 0.0
    %316 = vmatprep.subr.mxu0 0.0
    %317 = vmatpush2.msra.mxu0 0.0
    %318 = vmatprep.subr.mxu0 0.0
    %319 = vmatpush2.msra.mxu0 0.0
    %320 = vmatprep.subr.mxu0 0.0
    %321 = vmatpush2.msra.mxu0 0.0
    %322 = vmatprep.subr.mxu0 0.0
    %323 = vmatpush2.msra.mxu0 0.0
    %324 = vmatprep.subr.mxu0 0.0
    %325 = vmatpush2.msra.mxu0 0.0
    %326 = vmatprep.subr.mxu0 0.0
    %327 = vmatpush2.msra.mxu0 0.0
    %328 = vmatprep.subr.mxu0 0.0
    %329 = vmatpush2.msra.mxu0 0.0
    %330 = vmatprep.subr.mxu0 0.0
    %331 = vmatpush2.msra.mxu0 0.0
    %332 = vmatprep.subr.mxu0 0.0
    %333 = vmatpush2.msra.mxu0 0.0
    %334 = vmatprep.subr.mxu0 0.0
    %335 = vmatpush2.msra.mxu0 0.0
    %336 = vmatprep.subr.mxu0 0.0
    %337 = vmatpush2.msra.mxu0 0.0
    %338 = vmatprep.subr.mxu0 0.0
    %339 = vmatpush2.msra.mxu0 0.0
    %340 = vmatprep.subr.mxu0 0.0
    %341 = vmatpush2.msra.mxu0 0.0
    %342 = vmatprep.subr.mxu0 0.0
    %343 = vmatpush2.msra.mxu0 0.0
    %344 = vmatprep.subr.mxu0 0.0
    %345 = vmatpush2.msra.mxu0 0.0
    %346 = vmatprep.mubr.f32.mxu0 0.0
    %347 = vmatmul.mubr.f32.gmra.mxu0 %v107
    %v348 = vpop.f32.mrf.mxu0
    %v349 = vadd.f32 0.0, %v348
    %v350 = vpop.f32.mrf.mxu0
    %351 = vmatprep.mubr.f32.mxu0 0.0
    %352 = vmatmul.mubr.f32.gmra.mxu0 %v110
    %v353 = vpop.f32.mrf.mxu0
    %v354 = vadd.f32 0.0, %v353
    %v355 = vpop.f32.mrf.mxu0
    %356 = vdwg.mxu0
    %v357 = vadd.f32 %v276, %v349
    %v358 = vadd.f32 %v277, %v354
    %359 = vst.msk [vmem:[#allocation4] sm:$0xff] %vm105, %v357
    %360 = vst.msk [vmem:[#allocation4 + $0x8] sm:$0xff] %vm105, %v358
    // Predicated region
    $region50: #{tpu_custom_call.1} parent=1 // pred_check
      %p361 = pneg %p86
    $region51: #{tpu_custom_call.1} parent=1 // pred_check_branch
      %363 = sbr.rel (%p361) target = $region53
    $region52: #{tpu_custom_call.1} parent=1 // pred_region
      %v364 = vld [vmem:[#allocation2] sm:$0xff]
      %v365 = vld [vmem:[#allocation2 + $0x8] sm:$0xff]
      %v366 = vld [vmem:[%s4] sm:$0x1]
      %v368 = vlaneseq
      %v369 = vshrl.u32 %v368, 7
      %v370 = vsub.s32 0, %v369
      %v371 = vrot.slane %v366, %v370
      %v373 = vadd.f32 %v364, %v371
      %v374 = vadd.f32 %v365, %v371
      %v375 = vmul.f32 %v373, 0.35355338
      %v376 = vmul.f32 %v374, 0.35355338
      %377 = vst.msk [vmem:[#allocation13] sm:$0xff] %vm105, %v375
      %378 = vst.msk [vmem:[#allocation13 + $0x8] sm:$0xff] %vm105, %v376
      %v379 = vld [vmem:[#allocation3] sm:$0xff]
      %v380 = vld [vmem:[#allocation3 + $0x8] sm:$0xff]
      %v381 = vld [vmem:[%s5] sm:$0x1]
      %v383 = vlaneseq
      %v384 = vshrl.u32 %v383, 7
      %v385 = vsub.s32 0, %v384
      %v386 = vrot.slane %v381, %v385
      %v388 = vadd.f32 %v379, %v386
      %v389 = vadd.f32 %v380, %v386
      %390 = vst.msk [vmem:[#allocation14] sm:$0xff] %vm105, %v388
      %391 = vst.msk [vmem:[#allocation14 + $0x8] sm:$0xff] %vm105, %v389
      %v392 = vld [vmem:[#allocation4] sm:$0xff]
      %v393 = vld [vmem:[#allocation4 + $0x8] sm:$0xff]
      %v394 = vld [vmem:[%s6] sm:$0x1]
      %v396 = vlaneseq
      %v397 = vshrl.u32 %v396, 7
      %v398 = vsub.s32 0, %v397
      %v399 = vrot.slane %v394, %v398
      %v401 = vadd.f32 %v392, %v399
      %v402 = vadd.f32 %v393, %v399
      %403 = vst.msk [vmem:[#allocation16] sm:$0xff] %vm105, %v401
      %404 = vst.msk [vmem:[#allocation16 + $0x8] sm:$0xff] %vm105, %v402
    $region53: #{tpu_custom_call.1} parent=1 // pred_fallthru
      _
    // Predicated region
    $region54: #{tpu_custom_call.1} parent=1 // pred_check
      _
    $region55: #{tpu_custom_call.1} parent=1 // pred_check_branch
      %406 = sbr.rel (0) target = $region57
    $region56: #{tpu_custom_call.1} parent=1 // pred_region
      %s408 = ssub.s32 256, 256
      %409 = vsyncadd [#allocation7], %s408
      %s410 = sshll.u32 [#allocation13], 4
      %s411 = int_to_ptr.vmem [resolvable:$true] %s410
      %416 = dma.vmem_to_hbm [thread:$0]  %s411, 256, %s7, [#allocation7], 128, 128, 8
    $region57: #{tpu_custom_call.1} parent=1 // pred_fallthru
      _
    // Predicated region
    $region58: #{tpu_custom_call.1} parent=1 // pred_check
      _
    $region59: #{tpu_custom_call.1} parent=1 // pred_check_branch
      %418 = sbr.rel (0) target = $region61
    $region60: #{tpu_custom_call.1} parent=1 // pred_region
      %s420 = ssub.s32 256, 256
      %421 = vsyncadd [#allocation15], %s420
      %s422 = sshll.u32 [#allocation14], 4
      %s423 = int_to_ptr.vmem [resolvable:$true] %s422
      %428 = dma.vmem_to_hbm [thread:$0]  %s423, 256, %s8, [#allocation15], 128, 128, 8
    $region61: #{tpu_custom_call.1} parent=1 // pred_fallthru
      _
    // Predicated region
    $region62: #{tpu_custom_call.1} parent=1 // pred_check
      _
    $region63: #{tpu_custom_call.1} parent=1 // pred_check_branch
      %430 = sbr.rel (0) target = $region65
    $region64: #{tpu_custom_call.1} parent=1 // pred_region
      %s432 = ssub.s32 256, 256
      %433 = vsyncadd [#allocation15], %s432
      %s434 = sshll.u32 [#allocation16], 4
      %s435 = int_to_ptr.vmem [resolvable:$true] %s434
      %440 = dma.vmem_to_hbm [thread:$0]  %s435, 256, %s9, [#allocation15], 128, 128, 8
    $region65: #{tpu_custom_call.1} parent=1 // pred_fallthru
      _
    // Predicated region
    $region66: #{tpu_custom_call.1} parent=1 // pred_check
      _
    $region67: #{tpu_custom_call.1} parent=1 // pred_check_branch
      %442 = sbr.rel (0) target = $region69
    $region68: #{tpu_custom_call.1} parent=1 // pred_region
      %443 = dma.done [#allocation7], 256
    $region69: #{tpu_custom_call.1} parent=1 // pred_fallthru
      _
    // Predicated region
    $region70: #{tpu_custom_call.1} parent=1 // pred_check
      _
    $region71: #{tpu_custom_call.1} parent=1 // pred_check_branch
      %445 = sbr.rel (0) target = $region73
    $region72: #{tpu_custom_call.1} parent=1 // pred_region
      %446 = dma.done [#allocation15], 256
    $region73: #{tpu_custom_call.1} parent=1 // pred_fallthru
      _
    // Predicated region
    $region74: #{tpu_custom_call.1} parent=1 // pred_check
      _
    $region75: #{tpu_custom_call.1} parent=1 // pred_check_branch
      %448 = sbr.rel (0) target = $region77
    $region76: #{tpu_custom_call.1} parent=1 // pred_region
      %449 = dma.done [#allocation15], 256
    $region77: #{tpu_custom_call.1} parent=1 // pred_fallthru
      _
    %450 = vsyncpa [#allocation6], 1
    %451 = vsyncpa [#allocation9], 1
    %452 = vsyncpa [#allocation12], 1
    %453 = vsyncpa [#allocation7], 1
    %454 = vsyncpa [#allocation15], 1

</llo_original>
